<compile_context>
chip_gen: v7x
topology: tpu7x:2x2x1
jax: 0.10.0
libtpu: 0.0.40
codegen_flags: <defaults>
</compile_context>

<pallas_src>
import jax
import jax.numpy as jnp
from jax.experimental import pallas as pl
from jax.experimental.pallas import tpu as pltpu

_TARGET_IN_BYTES = 2 * 1024 * 1024      # ~2 MiB of input per grid step
_VMEM_LIMIT_BYTES = 48 * 1024 * 1024    # safe on v5e/v6e (128 MiB) and v7x (64 MiB)


def _sobel_kernel(x_ref, o_ref):
    # x_ref: (Bt, H, W) tile in the caller's dtype (cast to f32 in-kernel).
    # o_ref: (Bt, 2, H, W) f32; channel 0 = dx, channel 1 = dy.
    _, H, W = x_ref.shape
    x = x_ref[...].astype(jnp.float32)

    # Masks that zero out the row/column wrapped around by the rotates,
    # reproducing the 1-pixel zero padding of the Conv2d.
    row = jax.lax.broadcasted_iota(jnp.int32, (1, H, W), 1)
    col = jax.lax.broadcasted_iota(jnp.int32, (1, H, W), 2)

    # Row (sublane) neighbours: up[i,j] = x[i-1,j], down[i,j] = x[i+1,j].
    up = jnp.where(row == 0, 0.0, pltpu.roll(x, shift=1, axis=1))
    down = jnp.where(row == H - 1, 0.0, pltpu.roll(x, shift=H - 1, axis=1))

    # Shared separable vertical passes.
    vs = up + 2.0 * x + down     # vertical [1, 2, 1]
    vd = up - down               # vertical [1, 0, -1]

    # Column (lane) neighbours on the two vertical intermediates.
    vs_l = jnp.where(col == 0, 0.0, pltpu.roll(vs, shift=1, axis=2))
    vs_r = jnp.where(col == W - 1, 0.0, pltpu.roll(vs, shift=W - 1, axis=2))
    vd_l = jnp.where(col == 0, 0.0, pltpu.roll(vd, shift=1, axis=2))
    vd_r = jnp.where(col == W - 1, 0.0, pltpu.roll(vd, shift=W - 1, axis=2))

    dx = vs_l - vs_r                  # horizontal [1, 0, -1] applied to vs
    dy = vd_l + 2.0 * vd + vd_r       # horizontal [1, 2, 1] applied to vd

    # Direct full-tile stores, no reshape.
    o_ref[:, 0, :, :] = dx
    o_ref[:, 1, :, :] = dy


def sobel(x, *, block_batch=None):
    """x: (N, 1, H, W) -> (N, 2, H, W) float32 (dx, dy), matching Sobel.forward."""
    N, C, H, W = x.shape
    assert C == 1, "Sobel conv expects a single input channel"
    x2 = x[:, 0]  # (N, H, W); keep caller dtype — cast happens inside the kernel

    if block_batch is None:
        itemsize = x2.dtype.itemsize
        bt = max(1, _TARGET_IN_BYTES // max(H * W * itemsize, 1))
        if N >= 2:
            bt = min(bt, N // 2)  # >= 2 grid steps so v7x megacore has work to split
        block_batch = max(1, min(bt, N))
    Bt = int(block_batch)

    # cdiv grid: a partial last block is fine — OOB batch rows are only read
    # into unused lanes of the block and their stores are dropped by Pallas.
    grid = (pl.cdiv(N, Bt),)

    out = pl.pallas_call(
        _sobel_kernel,
        out_shape=jax.ShapeDtypeStruct((N, 2, H, W), jnp.float32),
        grid_spec=pltpu.PrefetchScalarGridSpec(
            num_scalar_prefetch=0,
            grid=grid,
            in_specs=[pl.BlockSpec((Bt, H, W), lambda n: (n, 0, 0))],
            out_specs=pl.BlockSpec((Bt, 2, H, W), lambda n: (n, 0, 0, 0)),
        ),
        compiler_params=pltpu.CompilerParams(
            dimension_semantics=("parallel",),
            vmem_limit_bytes=_VMEM_LIMIT_BYTES,
        ),
    )(x2)
    return out


def _reference_sobel(x):
    """Pure-JAX reference mirroring the PyTorch module (Conv2d cross-correlation)."""
    kx = jnp.array([[1., 0., -1.], [2., 0., -2.], [1., 0., -1.]], jnp.float32)
    ky = jnp.array([[1., 2., 1.], [0., 0., 0.], [-1., -2., -1.]], jnp.float32)
    k = jnp.stack([kx, ky])[:, None]  # (2, 1, 3, 3) OIHW
    return jax.lax.conv_general_dilated(
        x.astype(jnp.float32), k,
        window_strides=(1, 1), padding=((1, 1), (1, 1)),
        dimension_numbers=("NCHW", "OIHW", "NCHW"))


if __name__ == "__main__":
    key = jax.random.PRNGKey(0)
    x = jax.random.normal(key, (2, 1, 16, 16), dtype=jnp.float32)

    out = sobel(x)
    jax.block_until_ready(out)

    ref = _reference_sobel(x)
    assert out.shape == (2, 2, 16, 16)
    assert jnp.allclose(out, ref, atol=1e-5, rtol=1e-5), "mismatch vs conv reference"

    print("KERNEL_OK")
</pallas_src>

<mosaic_0001>
module attributes {stable_mosaic.version = 11 : i64} {
  func.func @_sobel_kernel(%arg0: i32, %arg1: memref<1x16x16xf32, #tpu.memory_space<vmem>>, %arg2: memref<1x2x16x16xf32, #tpu.memory_space<vmem>>) attributes {dimension_semantics = [#tpu.dimension_semantics<parallel>], iteration_bounds = array<i64: 2>, scalar_prefetch = 0 : i64, scratch_operands = 0 : i64, tpu.core_type = #tpu.core_type<tc>, window_params = [{transform_indices = @transform_0, window_bounds = array<i64: 1, 16, 16>}, {transform_indices = @transform_1, window_bounds = array<i64: 1, 2, 16, 16>}]} {
    %c0 = arith.constant 0 : index
    %c0_0 = arith.constant 0 : index
    %c0_1 = arith.constant 0 : index
    %0 = vector.load %arg1[%c0, %c0_0, %c0_1] : memref<1x16x16xf32, #tpu.memory_space<vmem>>, vector<1x16x16xf32>
    %1 = tpu.iota {dimensions = array<i32: 1>} : vector<1x16x16xi32>
    %2 = tpu.iota {dimensions = array<i32: 2>} : vector<1x16x16xi32>
    %c0_i32 = arith.constant 0 : i32
    %3 = vector.broadcast %c0_i32 : i32 to vector<1x16x16xi32>
    %4 = arith.cmpi eq, %1, %3 : vector<1x16x16xi32>
    %c1_i32 = arith.constant 1 : i32
    %5 = tpu.dynamic_rotate %0 by %c1_i32 dim 1 : vector<1x16x16xf32>, i32 -> vector<1x16x16xf32>
    %cst = arith.constant 0.000000e+00 : f32
    %6 = vector.broadcast %cst : f32 to vector<1x16x16xf32>
    %7 = arith.select %4, %6, %5 : vector<1x16x16xi1>, vector<1x16x16xf32>
    %c15_i32 = arith.constant 15 : i32
    %8 = vector.broadcast %c15_i32 : i32 to vector<1x16x16xi32>
    %9 = arith.cmpi eq, %1, %8 : vector<1x16x16xi32>
    %c15_i32_2 = arith.constant 15 : i32
    %10 = tpu.dynamic_rotate %0 by %c15_i32_2 dim 1 : vector<1x16x16xf32>, i32 -> vector<1x16x16xf32>
    %cst_3 = arith.constant 0.000000e+00 : f32
    %11 = vector.broadcast %cst_3 : f32 to vector<1x16x16xf32>
    %12 = arith.select %9, %11, %10 : vector<1x16x16xi1>, vector<1x16x16xf32>
    %cst_4 = arith.constant 2.000000e+00 : f32
    %13 = vector.broadcast %cst_4 : f32 to vector<1x16x16xf32>
    %14 = arith.mulf %13, %0 : vector<1x16x16xf32>
    %15 = arith.addf %7, %14 : vector<1x16x16xf32>
    %16 = arith.addf %15, %12 : vector<1x16x16xf32>
    %17 = arith.subf %7, %12 : vector<1x16x16xf32>
    %c0_i32_5 = arith.constant 0 : i32
    %18 = vector.broadcast %c0_i32_5 : i32 to vector<1x16x16xi32>
    %19 = arith.cmpi eq, %2, %18 : vector<1x16x16xi32>
    %c1_i32_6 = arith.constant 1 : i32
    %20 = tpu.dynamic_rotate %16 by %c1_i32_6 dim 2 : vector<1x16x16xf32>, i32 -> vector<1x16x16xf32>
    %cst_7 = arith.constant 0.000000e+00 : f32
    %21 = vector.broadcast %cst_7 : f32 to vector<1x16x16xf32>
    %22 = arith.select %19, %21, %20 : vector<1x16x16xi1>, vector<1x16x16xf32>
    %c15_i32_8 = arith.constant 15 : i32
    %23 = vector.broadcast %c15_i32_8 : i32 to vector<1x16x16xi32>
    %24 = arith.cmpi eq, %2, %23 : vector<1x16x16xi32>
    %c15_i32_9 = arith.constant 15 : i32
    %25 = tpu.dynamic_rotate %16 by %c15_i32_9 dim 2 : vector<1x16x16xf32>, i32 -> vector<1x16x16xf32>
    %cst_10 = arith.constant 0.000000e+00 : f32
    %26 = vector.broadcast %cst_10 : f32 to vector<1x16x16xf32>
    %27 = arith.select %24, %26, %25 : vector<1x16x16xi1>, vector<1x16x16xf32>
    %c0_i32_11 = arith.constant 0 : i32
    %28 = vector.broadcast %c0_i32_11 : i32 to vector<1x16x16xi32>
    %29 = arith.cmpi eq, %2, %28 : vector<1x16x16xi32>
    %c1_i32_12 = arith.constant 1 : i32
    %30 = tpu.dynamic_rotate %17 by %c1_i32_12 dim 2 : vector<1x16x16xf32>, i32 -> vector<1x16x16xf32>
    %cst_13 = arith.constant 0.000000e+00 : f32
    %31 = vector.broadcast %cst_13 : f32 to vector<1x16x16xf32>
    %32 = arith.select %29, %31, %30 : vector<1x16x16xi1>, vector<1x16x16xf32>
    %c15_i32_14 = arith.constant 15 : i32
    %33 = vector.broadcast %c15_i32_14 : i32 to vector<1x16x16xi32>
    %34 = arith.cmpi eq, %2, %33 : vector<1x16x16xi32>
    %c15_i32_15 = arith.constant 15 : i32
    %35 = tpu.dynamic_rotate %17 by %c15_i32_15 dim 2 : vector<1x16x16xf32>, i32 -> vector<1x16x16xf32>
    %cst_16 = arith.constant 0.000000e+00 : f32
    %36 = vector.broadcast %cst_16 : f32 to vector<1x16x16xf32>
    %37 = arith.select %34, %36, %35 : vector<1x16x16xi1>, vector<1x16x16xf32>
    %38 = arith.subf %22, %27 : vector<1x16x16xf32>
    %cst_17 = arith.constant 2.000000e+00 : f32
    %39 = vector.broadcast %cst_17 : f32 to vector<1x16x16xf32>
    %40 = arith.mulf %39, %17 : vector<1x16x16xf32>
    %41 = arith.addf %32, %40 : vector<1x16x16xf32>
    %42 = arith.addf %41, %37 : vector<1x16x16xf32>
    %c0_18 = arith.constant 0 : index
    %c0_19 = arith.constant 0 : index
    %c0_20 = arith.constant 0 : index
    %c0_21 = arith.constant 0 : index
    %43 = vector.load %arg2[%c0_18, %c0_19, %c0_20, %c0_21] : memref<1x2x16x16xf32, #tpu.memory_space<vmem>>, vector<1x1x16x16xf32>
    %44 = vector.shape_cast %43 : vector<1x1x16x16xf32> to vector<1x16x16xf32>
    %45 = vector.shape_cast %38 : vector<1x16x16xf32> to vector<1x1x16x16xf32>
    tpu.vector_store %arg2[%c0_18, %c0_19, %c0_20, %c0_21], %45 {strides = array<i32>} : memref<1x2x16x16xf32, #tpu.memory_space<vmem>>, vector<1x1x16x16xf32>,
    %c0_22 = arith.constant 0 : index
    %c1 = arith.constant 1 : index
    %c0_23 = arith.constant 0 : index
    %c0_24 = arith.constant 0 : index
    %46 = vector.load %arg2[%c0_22, %c1, %c0_23, %c0_24] : memref<1x2x16x16xf32, #tpu.memory_space<vmem>>, vector<1x1x16x16xf32>
    %47 = vector.shape_cast %46 : vector<1x1x16x16xf32> to vector<1x16x16xf32>
    %48 = vector.shape_cast %42 : vector<1x16x16xf32> to vector<1x1x16x16xf32>
    tpu.vector_store %arg2[%c0_22, %c1, %c0_23, %c0_24], %48 {strides = array<i32>} : memref<1x2x16x16xf32, #tpu.memory_space<vmem>>, vector<1x1x16x16xf32>,
    return
  }
  func.func @transform_0(%arg0: i32) -> (i32, i32, i32) {
    %c0_i32 = arith.constant 0 : i32
    %c0_i32_0 = arith.constant 0 : i32
    %c0_i32_1 = arith.constant 0 : i32
    return %arg0, %c0_i32, %c0_i32_0 : i32, i32, i32
  }
  func.func @transform_1(%arg0: i32) -> (i32, i32, i32, i32) {
    %c0_i32 = arith.constant 0 : i32
    %c0_i32_0 = arith.constant 0 : i32
    %c0_i32_1 = arith.constant 0 : i32
    %c0_i32_2 = arith.constant 0 : i32
    return %arg0, %c0_i32, %c0_i32_0, %c0_i32_1 : i32, i32, i32, i32
  }
}

</mosaic_0001>

<llo_original>
// kernel: tpu_custom_call.1
$region0: #{tpu_custom_call.1}
  #allocation0 [shape = 'u32[]', space=smem, size = 0x4, offset = 0x4, fixed_abs, tag = 'smem constant byte address 0x4 - core index']
  #allocation1 [shape = 'u32[144,128]{1,0:T(1,128)}', space=vmem, size = 0x12000, scoped, tag = 'internal scratch']
  %s0 = inlined_call_operand.hbm [shape: f32[2,16,16], index: 0, kind: input, shape index: {}]
  %s1 = inlined_call_operand.hbm [shape: f32[2,2,16,16], index: 1, kind: output, shape index: {}]
  %s2 = sld [smem:[#allocation0]]
  $region41: #{tpu_custom_call.1} parent=0
    _
  %s4 = ssub.s32 1, %s2
  %s5 = scalar_select 0, %s4, %s2
  $region1: #{tpu_custom_call.1} parent=0
    #allocation2 [shape = 'u8[16384]{0}', space=vmem, size = 0x4000, scoped, tag = 'input window, operand 0']
    #allocation3 [shape = 's32[2]{0}', space=sflag, size = 0x8, scoped, tag = 'scoped memory for tpu_custom_call.1']
    #allocation4 [shape = 's32[2]{0}', space=sflag, size = 0x8, scoped, tag = 'scoped memory for tpu_custom_call.1']
    #allocation5 [shape = 'u8[32768]{0}', space=vmem, size = 0x8000, scoped, tag = 'output window, operand 0']
    %6 = vsyncpa [#allocation3], 0
    %s7 = scalar_lea.sflag [#allocation3], 1
    %8 = vsyncpa %s7, 0
    %9 = vsyncpa [#allocation4], 0
    %s10 = scalar_lea.sflag [#allocation4], 1
    %11 = vsyncpa %s10, 0
    loop: start=0, step=1, limit=4
    $region2: #{tpu_custom_call.1} parent=1 // loop_pre_header
      _
    $region3: #{tpu_custom_call.1} parent=1 // loop_header
      %s13 = sphi 0, %s17
      %p14 = scmp.ge.s32.totalorder %s13, 4
      %s23 = sphi 0, %s25
      %s26 = sphi 0, %s23
      %s27 = sphi 0, %s26
      %s43 = sphi 0, %s27
      %s49 = sphi 0, %s51
      %s52 = sphi 0, %s49
      %s53 = sphi 0, %s52
      %s69 = sphi 0, %s53
    $region4: #{tpu_custom_call.1} parent=1 // loop_header_branch
      %16 = sbr.rel (%p14) target = $region8
    $region5: #{tpu_custom_call.1} parent=1 // loop_body
      %s18 = ssub.s32 %s13, 1
      %s19 = ssub.s32 %s13, 2
      %s20 = sadd.s32 %s13, 1
      %s21 = ssub.s32 %s13, %s20
      %p22 = scmp.eq.s32.totalorder %s21, 0
      %s24 = sadd.s32 %s23, 1
      %s25 = scalar_select %p22, %s23, %s24
      %p28 = pneg %p22
      %p29 = scmp.eq.s32.totalorder %s13, 1
      %p30 = por %p28, %p29
      %p31 = scmp.ne.s32.totalorder %s23, %s26
      %p32 = scmp.eq.s32.totalorder %s13, 0
      %p33 = por %p31, %p32
      %p34 = scmp.ne.s32.totalorder %s23, %s26
      %p35 = scmp.eq.s32.totalorder %s18, 1
      %p36 = por %p34, %p35
      %p37 = scmp.ne.s32.totalorder %s26, %s27
      %p38 = scmp.eq.s32.totalorder %s18, 0
      %p39 = por %p37, %p38
      %p40 = scmp.ne.s32.totalorder %s26, %s27
      %p41 = scmp.eq.s32.totalorder %s19, 1
      %p42 = por %p40, %p41
      %p44 = scmp.ne.s32.totalorder %s27, %s43
      %p45 = scmp.eq.s32.totalorder %s19, 0
      %p46 = por %p44, %p45
      %s47 = ssub.s32 %s13, %s20
      %p48 = scmp.eq.s32.totalorder %s47, 0
      %s50 = sadd.s32 %s49, 1
      %s51 = scalar_select %p48, %s49, %s50
      %p54 = pneg %p48
      %p55 = scmp.eq.s32.totalorder %s13, 1
      %p56 = por %p54, %p55
      %p57 = scmp.ne.s32.totalorder %s49, %s52
      %p58 = scmp.eq.s32.totalorder %s13, 0
      %p59 = por %p57, %p58
      %p60 = scmp.ne.s32.totalorder %s49, %s52
      %p61 = scmp.eq.s32.totalorder %s18, 1
      %p62 = por %p60, %p61
      %p63 = scmp.ne.s32.totalorder %s52, %s53
      %p64 = scmp.eq.s32.totalorder %s18, 0
      %p65 = por %p63, %p64
      %p66 = scmp.ne.s32.totalorder %s52, %s53
      %p67 = scmp.eq.s32.totalorder %s19, 1
      %p68 = por %p66, %p67
      %p70 = scmp.ne.s32.totalorder %s53, %s69
      %p71 = scmp.eq.s32.totalorder %s19, 0
      %p72 = por %p70, %p71
      %p73 = scmp.le.s32.totalorder 1, %s13
      %p74 = scmp.lt.s32.totalorder %s13, 3
      %p75 = pnand %p73, %p74
      %p76 = pneg %p75
      // Predicated region
      $region9: #{tpu_custom_call.1} parent=5 // pred_check
        _
      $region10: #{tpu_custom_call.1} parent=5 // pred_check_branch
        %78 = sbr.rel (%p75) target = $region12
      $region11: #{tpu_custom_call.1} parent=5 // pred_region
        %s79 = ssub.s32 %s13, 1
      $region12: #{tpu_custom_call.1} parent=5 // pred_fallthru
        _
      %p80 = scmp.lt.s32.totalorder %s13, 2
      // Predicated region
      $region13: #{tpu_custom_call.1} parent=5 // pred_check
        %p81 = pneg %p80
      $region14: #{tpu_custom_call.1} parent=5 // pred_check_branch
        %83 = sbr.rel (%p81) target = $region16
      $region15: #{tpu_custom_call.1} parent=5 // pred_region
        // Predicated region
        $region17: #{tpu_custom_call.1} parent=15 // pred_check
          %p84 = pneg %p33
        $region18: #{tpu_custom_call.1} parent=15 // pred_check_branch
          %86 = sbr.rel (%p84) target = $region20
        $region19: #{tpu_custom_call.1} parent=15 // pred_region
          %s87 = sand.u32 %s23, 1
          %s88 = scalar_lea.sflag [#allocation3], %s87
          %s89 = sand.u32 %s23, 1
          %s90 = smul.addr %s89, 16
          %s91 = scalar_lea.vmem [#allocation2], %s90
          %s93 = ssub.s32 256, 256
          %94 = vsyncadd %s88, %s93
          %s95 = smul.addr %s13, 2
          %s96 = smul.addr %s95, 128
          %s97 = scalar_lea.hbm %s0, %s96
          %s98 = sshll.u32 %s91, 4
          %s99 = int_to_ptr.vmem [resolvable:$true] %s98
          %104 = dma.hbm_to_vmem [thread:$0]  %s97, 256, %s99, %s88, 128, 128, 8
        $region20: #{tpu_custom_call.1} parent=15 // pred_fallthru
          _
      $region16: #{tpu_custom_call.1} parent=5 // pred_fallthru
        _
      %p105 = scmp.le.s32.totalorder 1, %s13
      %p106 = scmp.lt.s32.totalorder %s13, 3
      %p107 = pnand %p105, %p106
      %p108 = pneg %p107
      // Predicated region
      $region21: #{tpu_custom_call.1} parent=5 // pred_check
        _
      $region22: #{tpu_custom_call.1} parent=5 // pred_check_branch
        %110 = sbr.rel (%p107) target = $region24
      $region23: #{tpu_custom_call.1} parent=5 // pred_region
        %s111 = ssub.s32 %s13, 1
        %s112 = sand.u32 %s26, 1
        %s113 = scalar_lea.sflag [#allocation3], %s112
        %s114 = sand.u32 %s26, 1
        %s115 = smul.addr %s114, 16
        %s116 = scalar_lea.vmem [#allocation2], %s115
        // Predicated region
        $region25: #{tpu_custom_call.1} parent=23 // pred_check
          %p117 = pneg %p39
        $region26: #{tpu_custom_call.1} parent=23 // pred_check_branch
          %119 = sbr.rel (%p117) target = $region28
        $region27: #{tpu_custom_call.1} parent=23 // pred_region
          %120 = dma.done %s113, 256
        $region28: #{tpu_custom_call.1} parent=23 // pred_fallthru
          _
        %s121 = sand.u32 %s26, 1
        %s122 = scalar_lea.sflag [#allocation3], %s121
        %s123 = sand.u32 %s26, 1
        %s124 = smul.addr %s123, 16
        %s125 = scalar_lea.vmem [#allocation2], %s124
        %p126 = pneg %p39
        %p127 = pneg %p36
        %p128 = pneg %p65
        %p129 = pneg %p62
        %s130 = sand.u32 %s52, 1
        %s131 = scalar_lea.sflag [#allocation4], %s130
        %s132 = sand.u32 %s52, 1
        %s133 = smul.addr %s132, 32
        %s134 = scalar_lea.vmem [#allocation5], %s133
        %v135 = vld [vmem:[%s116] sm:$0xff]
        %v136 = vld [vmem:[%s116 + $0x8] sm:$0xff]
        %v137 = vlaneseq
        %v138 = vshrl.u32 %v137, 7
        %v139 = vadd.s32 %v138, 8
        %v140 = vlaneseq
        %v141 = vand.u32 %v140, 127
        %vm142 = vcmp.eq.s32.totalorder %v138, 0
        %vm143 = vcmp.eq.s32.totalorder %v139, 0
        %v144 = vrot.slane %v135, 7
        %v145 = vrot.slane %v136, 7
        %vm146 = vcmp.lt.s32.totalorder %v138, 1
        %v147 = vsel %vm146, %v144, %v145
        %v148 = vsel %vm146, %v145, %v144
        %v149 = vsel %vm142, 0.0, %v148
        %v150 = vsel %vm143, 0.0, %v147
        %vm151 = vcmp.eq.s32.totalorder %v138, 15
        %vm152 = vcmp.eq.s32.totalorder %v139, 15
        %v153 = vrot.slane %v135, 1
        %v154 = vrot.slane %v136, 1
        %vm155 = vcmp.lt.s32.totalorder %v138, 7
        %v156 = vsel %vm155, %v153, %v154
        %v157 = vsel %vm155, %v154, %v153
        %v158 = vsel %vm151, 0.0, %v156
        %v159 = vsel %vm152, 0.0, %v157
        %v160 = vmul.f32 %v135, 2.0
        %v161 = vmul.f32 %v136, 2.0
        %v162 = vadd.f32 %v149, %v160
        %v163 = vadd.f32 %v150, %v161
        %v164 = vadd.f32 %v162, %v158
        %v165 = vadd.f32 %v163, %v159
        %v166 = vsub.f32 %v149, %v158
        %v167 = vsub.f32 %v150, %v159
        %vm168 = vcmp.eq.s32.totalorder %v141, 0
        %vm169 = vcmask 1047680
        %170 = vrot.lane.b32.xlu0 %v164, 16
        %v171 = vpop.permute.xlu0 %170
        %v172 = vsel %vm169, %v171, %v164
        %173 = vrot.lane.b32.xlu0 %v165, 16
        %v174 = vpop.permute.xlu0 %173
        %v175 = vsel %vm169, %v174, %v165
        %176 = vrot.lane.b32.xlu0 %v172, 16
        %v177 = vpop.permute.xlu0 %176
        %178 = vrot.lane.b32.xlu0 %v175, 16
        %v179 = vpop.permute.xlu0 %178
        %v180 = vsel %vm169, %v177, %v164
        %v181 = vsel %vm169, %v179, %v165
        %184 = vrot.lane.b32.xlu0 %v180, 113
        %v185 = vpop.permute.xlu0 %184
        %186 = vrot.lane.b32.xlu0 %v181, 113
        %v187 = vpop.permute.xlu0 %186
        %v190 = vsel %vm168, 0.0, %v185
        %v191 = vsel %vm168, 0.0, %v187
        %vm192 = vcmp.eq.s32.totalorder %v141, 15
        %193 = vrot.lane.b32.xlu0 %v180, 127
        %v194 = vpop.permute.xlu0 %193
        %195 = vrot.lane.b32.xlu0 %v181, 127
        %v196 = vpop.permute.xlu0 %195
        %v199 = vsel %vm192, 0.0, %v194
        %v200 = vsel %vm192, 0.0, %v196
        %201 = vrot.lane.b32.xlu0 %v166, 16
        %v202 = vpop.permute.xlu0 %201
        %v203 = vsel %vm169, %v202, %v166
        %204 = vrot.lane.b32.xlu0 %v167, 16
        %v205 = vpop.permute.xlu0 %204
        %v206 = vsel %vm169, %v205, %v167
        %207 = vrot.lane.b32.xlu0 %v203, 16
        %v208 = vpop.permute.xlu0 %207
        %209 = vrot.lane.b32.xlu0 %v206, 16
        %v210 = vpop.permute.xlu0 %209
        %v211 = vsel %vm169, %v208, %v166
        %v212 = vsel %vm169, %v210, %v167
        %215 = vrot.lane.b32.xlu0 %v211, 113
        %v216 = vpop.permute.xlu0 %215
        %217 = vrot.lane.b32.xlu0 %v212, 113
        %v218 = vpop.permute.xlu0 %217
        %v221 = vsel %vm168, 0.0, %v216
        %v222 = vsel %vm168, 0.0, %v218
        %223 = vrot.lane.b32.xlu0 %v211, 127
        %v224 = vpop.permute.xlu0 %223
        %225 = vrot.lane.b32.xlu0 %v212, 127
        %v226 = vpop.permute.xlu0 %225
        %v229 = vsel %vm192, 0.0, %v224
        %v230 = vsel %vm192, 0.0, %v226
        %v231 = vsub.f32 %v190, %v199
        %v232 = vsub.f32 %v191, %v200
        %v233 = vmul.f32 %v166, 2.0
        %v234 = vmul.f32 %v167, 2.0
        %v235 = vadd.f32 %v221, %v233
        %v236 = vadd.f32 %v222, %v234
        %v237 = vadd.f32 %v235, %v229
        %v238 = vadd.f32 %v236, %v230
        %vm239 = vcmask 130048
        %240 = vst.msk [vmem:[%s134] sm:$0xff] %vm239, %v231
        %241 = vst.msk [vmem:[%s134 + $0x8] sm:$0xff] %vm239, %v232
        %s242 = scalar_lea.vmem %s134, 16 [#allocation5]
        %243 = vst.msk [vmem:[%s242] sm:$0xff] %vm239, %v237
        %244 = vst.msk [vmem:[%s242 + $0x8] sm:$0xff] %vm239, %v238
        %s245 = sand.u32 %s52, 1
        %s246 = scalar_lea.sflag [#allocation4], %s245
        %s247 = sand.u32 %s52, 1
        %s248 = smul.addr %s247, 32
        %s249 = scalar_lea.vmem [#allocation5], %s248
        // Predicated region
        $region29: #{tpu_custom_call.1} parent=23 // pred_check
          %p250 = pneg %p62
        $region30: #{tpu_custom_call.1} parent=23 // pred_check_branch
          %252 = sbr.rel (%p250) target = $region32
        $region31: #{tpu_custom_call.1} parent=23 // pred_region
          %s254 = ssub.s32 512, 512
          %255 = vsyncadd %s246, %s254
          %s256 = smul.addr %s18, 4
          %s257 = smul.addr %s256, 128
          %s258 = scalar_lea.hbm %s1, %s257
          %s259 = sshll.u32 %s249, 4
          %s260 = int_to_ptr.vmem [resolvable:$true] %s259
          %265 = dma.vmem_to_hbm [thread:$0]  %s260, 512, %s258, %s246, 128, 128, 8
        $region32: #{tpu_custom_call.1} parent=23 // pred_fallthru
          _
      $region24: #{tpu_custom_call.1} parent=5 // pred_fallthru
        _
      %p266 = scmp.le.s32.totalorder 2, %s13
      // Predicated region
      $region33: #{tpu_custom_call.1} parent=5 // pred_check
        %p267 = pneg %p266
      $region34: #{tpu_custom_call.1} parent=5 // pred_check_branch
        %269 = sbr.rel (%p267) target = $region36
      $region35: #{tpu_custom_call.1} parent=5 // pred_region
        %s270 = ssub.s32 %s13, 2
        // Predicated region
        $region37: #{tpu_custom_call.1} parent=35 // pred_check
          %p271 = pneg %p68
        $region38: #{tpu_custom_call.1} parent=35 // pred_check_branch
          %273 = sbr.rel (%p271) target = $region40
        $region39: #{tpu_custom_call.1} parent=35 // pred_region
          %s274 = sand.u32 %s53, 1
          %s275 = scalar_lea.sflag [#allocation4], %s274
          %s276 = sand.u32 %s53, 1
          %s277 = smul.addr %s276, 32
          %s278 = scalar_lea.vmem [#allocation5], %s277
          %279 = dma.done %s275, 512
        $region40: #{tpu_custom_call.1} parent=35 // pred_fallthru
          _
      $region36: #{tpu_custom_call.1} parent=5 // pred_fallthru
        _
    $region6: #{tpu_custom_call.1} parent=1 // loop_footer
      %s17 = sadd.s32 1, %s13
    $region7: #{tpu_custom_call.1} parent=1 // loop_footer_branch
      %12 = sbr.rel target = $region3
    $region8: #{tpu_custom_call.1} parent=1 // loop_exit
      _
    %280 = vsyncpa [#allocation3], 1
    %s281 = scalar_lea.sflag [#allocation3], 1
    %282 = vsyncpa %s281, 1
    %283 = vsyncpa [#allocation4], 1
    %s284 = scalar_lea.sflag [#allocation4], 1
    %285 = vsyncpa %s284, 1

</llo_original>
